<compile_context>
chip_gen: v6e
topology: v6e:2x2x1
jax: 0.10.0
libtpu: 0.0.40
codegen_flags: <defaults>
</compile_context>

<pallas_src>
import functools

import jax
import jax.numpy as jnp
from jax.experimental import pallas as pl
from jax.experimental.pallas import tpu as pltpu

_LANE = 128                       # lane width: weight/bias padded to this on O
_MIN_TB = 512                     # minimum batch tile (rows) once B is large
_X_TILE_TARGET_BYTES = 2 << 20    # aim for >= ~2 MiB of x per tile (DMA amortization)
_VMEM_BUDGET = 40 << 20           # conservative: fits v7x 64 MiB / v5e scoped VMEM
_NEG_BIG = -1e30                  # padding-logit value (NOT -inf: avoids NaN rows)


def _fc_softmax_kernel(x_ref, w_ref, b_ref, o_ref, *, out_size):
    """(TB, D) @ (D, O_pad) + bias, row-softmax, store first `out_size` cols.

    Padded output columns carry a -1e30 bias (their weight columns are zero),
    so after max-subtraction their exp underflows to exactly 0 and they add
    nothing to the denominator -- no explicit mask needed in the kernel.
    """
    logits = jnp.dot(x_ref[...], w_ref[...],
                     preferred_element_type=jnp.float32) + b_ref[...]
    m = jnp.max(logits, axis=1, keepdims=True)
    e = jnp.exp(logits - m)
    denom = jnp.sum(e, axis=1, keepdims=True)
    # Exact reciprocal (plain divide): rows sum to 1 to f32 precision.
    o_ref[...] = (e[:, :out_size] / denom).astype(o_ref.dtype)


def _pick_tb(B, D, O):
    """Batch-tile rows: adaptive to D, VMEM-budget capped, megacore aware."""
    # Big enough to amortize the ~0.35 us per-grid-step overhead at skinny D.
    target = max(_MIN_TB, _X_TILE_TARGET_BYTES // (4 * D))
    # Cap so double-buffered x/out tiles + (conservatively double-buffered)
    # resident weight/bias stay inside the budget on every generation.
    o_pad = pl.cdiv(O, _LANE) * _LANE
    resident = 2 * 4 * D * o_pad + 2 * 4 * o_pad
    avail = max(_VMEM_BUDGET - resident, 2 << 20)
    cap = max(8, avail // (2 * 4 * (D + O)))
    tb = max(8, (min(target, cap) // 8) * 8)
    if B <= tb:
        if B > 64:
            # Split mid-sized batches into >= 2 grid steps so the "parallel"
            # axis can shard across the two TensorCores on v7x.
            tb = min(tb, ((-(-B // 2) + 7) // 8) * 8)
        else:
            tb = B        # single block (block dim == full array dim is legal)
    return tb


def _output_forward(x, weight, bias):
    """x: (B, D), weight: (O, D) (PyTorch layout), bias: (O,). float32."""
    B, D = x.shape
    O = weight.shape[0]
    O_pad = pl.cdiv(O, _LANE) * _LANE

    # One-time tiny prep, fused under jit:
    #  * weight -> (D, O_pad): canonical (TB,D)@(D,O_pad) MXU contraction;
    #    padded columns are zero.
    #  * bias   -> (1, O_pad): padded columns hold -1e30, baking the softmax
    #    padding mask into the bias add.
    w_p = jnp.pad(weight.T.astype(jnp.float32), ((0, 0), (0, O_pad - O)))
    b_p = jnp.pad(bias.astype(jnp.float32), (0, O_pad - O),
                  constant_values=_NEG_BIG).reshape(1, O_pad)

    tb = _pick_tb(B, D, O)
    grid = (pl.cdiv(B, tb),)          # ragged last block: no jnp.pad copy of x

    # Scoped-VMEM limit sized from the actual footprint so large-D shapes
    # neither overflow v7x's 64 MiB nor trip v5e's 16 MiB default.
    vmem_bytes = (2 * 4 * tb * D          # x tile, double-buffered
                  + 2 * 4 * tb * O        # out tile, double-buffered
                  + 2 * 4 * D * O_pad     # resident weight (count 2 buffers)
                  + 2 * 4 * O_pad         # resident bias
                  + (1 << 20))            # slack
    vmem_limit = int(min(max(vmem_bytes, 4 << 20), 56 << 20))

    kernel = functools.partial(_fc_softmax_kernel, out_size=O)

    out = pl.pallas_call(
        kernel,
        out_shape=jax.ShapeDtypeStruct((B, O), jnp.float32),
        grid=grid,
        in_specs=[
            pl.BlockSpec((tb, D), lambda i: (i, 0)),       # x: pipelined tiles
            pl.BlockSpec((D, O_pad), lambda i: (0, 0)),    # weight: VMEM-resident
            pl.BlockSpec((1, O_pad), lambda i: (0, 0)),    # bias:   VMEM-resident
        ],
        # Narrow (tb, O) output block: ~13x less HBM write traffic than a
        # 128-lane padded slab plus a wrapper slice (kernel is HBM-bound).
        out_specs=pl.BlockSpec((tb, O), lambda i: (i, 0)),
        compiler_params=pltpu.CompilerParams(
            dimension_semantics=("parallel",),             # megacore on v7x
            vmem_limit_bytes=vmem_limit,
        ),
        cost_estimate=pl.CostEstimate(
            flops=2 * B * D * O_pad,
            transcendentals=B * O_pad,
            bytes_accessed=4 * (B * D + B * O + D * O_pad + O_pad),
        ),
    )(x, w_p, b_p)

    return out


output_forward = jax.jit(_output_forward)


if __name__ == "__main__":
    # Small shapes consistent with the module: batch=8, input_size=32, output_size=10
    B, D, O = 8, 32, 10

    key = jax.random.PRNGKey(0)
    kx, kw, kb = jax.random.split(key, 3)

    x = jax.random.normal(kx, (B, D), dtype=jnp.float32)
    # PyTorch-style Linear init: uniform(-1/sqrt(D), 1/sqrt(D))
    bound = 1.0 / (D ** 0.5)
    weight = jax.random.uniform(kw, (O, D), minval=-bound, maxval=bound,
                                dtype=jnp.float32)
    bias = jax.random.uniform(kb, (O,), minval=-bound, maxval=bound,
                              dtype=jnp.float32)

    out = output_forward(x, weight, bias)
    jax.block_until_ready(out)

    # Reference check in plain JAX.
    ref = jax.nn.softmax(x @ weight.T + bias, axis=1)
    assert out.shape == (B, O)
    assert jnp.allclose(out, ref, atol=2e-3, rtol=2e-3)
    assert jnp.allclose(jnp.sum(out, axis=1), 1.0, atol=1e-3)

    print("KERNEL_OK")
</pallas_src>

<mosaic_0001>
module attributes {stable_mosaic.version = 11 : i64} {
  func.func @_fc_softmax_kernel(%arg0: i32, %arg1: memref<8x32xf32, #tpu.memory_space<vmem>>, %arg2: memref<32x128xf32, #tpu.memory_space<vmem>>, %arg3: memref<1x128xf32, #tpu.memory_space<vmem>>, %arg4: memref<8x10xf32, #tpu.memory_space<vmem>>) attributes {dimension_semantics = [#tpu.dimension_semantics<parallel>], iteration_bounds = array<i64: 1>, scalar_prefetch = 0 : i64, scratch_operands = 0 : i64, tpu.core_type = #tpu.core_type<tc>, window_params = [{transform_indices = @transform_0, window_bounds = array<i64: 8, 32>}, {pipeline_mode = #tpu.pipeline_mode<synchronous>, transform_indices = @transform_1, window_bounds = array<i64: 32, 128>}, {pipeline_mode = #tpu.pipeline_mode<synchronous>, transform_indices = @transform_2, window_bounds = array<i64: 1, 128>}, {transform_indices = @transform_3, window_bounds = array<i64: 8, 10>}]} {
    %c0 = arith.constant 0 : index
    %c0_0 = arith.constant 0 : index
    %0 = vector.load %arg1[%c0, %c0_0] : memref<8x32xf32, #tpu.memory_space<vmem>>, vector<8x32xf32>
    %c0_1 = arith.constant 0 : index
    %c0_2 = arith.constant 0 : index
    %1 = vector.load %arg2[%c0_1, %c0_2] : memref<32x128xf32, #tpu.memory_space<vmem>>, vector<32x128xf32>
    %cst = arith.constant dense<0.000000e+00> : vector<8x128xf32>
    %2 = tpu.matmul %0, %1, %cst {dimension_numbers = #tpu.dot_dimension_numbers<[1], [0], [0], [1], [0, 0, 1, 1], [], []>} : vector<8x32xf32>, vector<32x128xf32>, vector<8x128xf32> -> vector<8x128xf32>
    %c0_3 = arith.constant 0 : index
    %c0_4 = arith.constant 0 : index
    %3 = vector.load %arg3[%c0_3, %c0_4] : memref<1x128xf32, #tpu.memory_space<vmem>>, vector<1x128xf32>
    %4 = vector.broadcast %3 : vector<1x128xf32> to vector<8x128xf32>
    %5 = arith.addf %2, %4 : vector<8x128xf32>
    %cst_5 = arith.constant dense<0xFF800000> : vector<8xf32>
    %6 = vector.multi_reduction <maximumf>, %5, %cst_5 [1] : vector<8x128xf32> to vector<8xf32>
    %7 = vector.shape_cast %6 : vector<8xf32> to vector<8x1xf32>
    %8 = vector.broadcast %7 : vector<8x1xf32> to vector<8x128xf32>
    %9 = arith.subf %5, %8 : vector<8x128xf32>
    %10 = math.exp %9 : vector<8x128xf32>
    %cst_6 = arith.constant dense<0.000000e+00> : vector<8xf32>
    %11 = vector.multi_reduction <add>, %10, %cst_6 [1] : vector<8x128xf32> to vector<8xf32>
    %12 = vector.shape_cast %11 : vector<8xf32> to vector<8x1xf32>
    %13 = vector.extract_strided_slice %10 {offsets = [0, 0], sizes = [8, 10], strides = [1, 1]} : vector<8x128xf32> to vector<8x10xf32>
    %14 = vector.broadcast %12 : vector<8x1xf32> to vector<8x10xf32>
    %15 = arith.divf %13, %14 : vector<8x10xf32>
    %c0_7 = arith.constant 0 : index
    %c0_8 = arith.constant 0 : index
    %16 = vector.load %arg4[%c0_7, %c0_8] : memref<8x10xf32, #tpu.memory_space<vmem>>, vector<8x10xf32>
    tpu.vector_store %arg4[%c0_7, %c0_8], %15 {strides = array<i32>} : memref<8x10xf32, #tpu.memory_space<vmem>>, vector<8x10xf32>,
    return
  }
  func.func @transform_0(%arg0: i32) -> (i32, i32) {
    %c0_i32 = arith.constant 0 : i32
    %c0_i32_0 = arith.constant 0 : i32
    return %arg0, %c0_i32 : i32, i32
  }
  func.func @transform_1(%arg0: i32) -> (i32, i32) {
    %c0_i32 = arith.constant 0 : i32
    %c0_i32_0 = arith.constant 0 : i32
    %c0_i32_1 = arith.constant 0 : i32
    return %c0_i32, %c0_i32_0 : i32, i32
  }
  func.func @transform_2(%arg0: i32) -> (i32, i32) {
    %c0_i32 = arith.constant 0 : i32
    %c0_i32_0 = arith.constant 0 : i32
    %c0_i32_1 = arith.constant 0 : i32
    return %c0_i32, %c0_i32_0 : i32, i32
  }
  func.func @transform_3(%arg0: i32) -> (i32, i32) {
    %c0_i32 = arith.constant 0 : i32
    %c0_i32_0 = arith.constant 0 : i32
    return %arg0, %c0_i32 : i32, i32
  }
}

</mosaic_0001>

<llo_original>
// kernel: _output_forward.1
$region0: #{_output_forward.1}
  #allocation0 [shape = 'u32[]', space=smem, size = 0x4, offset = 0x4, fixed_abs, tag = 'smem constant byte address 0x4 - core index']
  #allocation1 [shape = 'u32[144,128]{1,0:T(1,128)}', space=vmem, size = 0x12000, scoped, tag = 'internal scratch']
  %s0 = inlined_call_operand.vmem [shape: f32[8,32], index: 0, kind: input, shape index: {}]
  %s1 = inlined_call_operand.vmem [shape: f32[32,128], index: 1, kind: input, shape index: {}]
  %s2 = inlined_call_operand.vmem [shape: f32[1,128], index: 2, kind: input, shape index: {}]
  %s3 = inlined_call_operand.hbm [shape: f32[8,10], index: 3, kind: output, shape index: {}]
  %s4 = sld [smem:[#allocation0]]
  $region22: #{_output_forward.1} parent=0
    _
  %s6 = ssub.s32 1, %s4
  %s7 = scalar_select 0, %s6, %s4
  $region1: #{_output_forward.1} parent=0
    #allocation2 [shape = 'u8[4096]{0}', space=vmem, size = 0x1000, scoped, tag = 'output window, operand 0, single buffered']
    #allocation3 [shape = 's32[1]{0}', space=sflag, size = 0x4, scoped, tag = 'scoped memory for _output_forward.1']
    %8 = vsyncpa [#allocation3], 0
    // Predicated region
    $region2: #{_output_forward.1} parent=1 // pred_check
      _
    $region3: #{_output_forward.1} parent=1 // pred_check_branch
      %10 = sbr.rel (0) target = $region5
    $region4: #{_output_forward.1} parent=1 // pred_region
      _
    $region5: #{_output_forward.1} parent=1 // pred_fallthru
      _
    // Predicated region
    $region6: #{_output_forward.1} parent=1 // pred_check
      _
    $region7: #{_output_forward.1} parent=1 // pred_check_branch
      %12 = sbr.rel (0) target = $region9
    $region8: #{_output_forward.1} parent=1 // pred_region
      _
    $region9: #{_output_forward.1} parent=1 // pred_fallthru
      _
    // Predicated region
    $region10: #{_output_forward.1} parent=1 // pred_check
      _
    $region11: #{_output_forward.1} parent=1 // pred_check_branch
      %14 = sbr.rel (0) target = $region13
    $region12: #{_output_forward.1} parent=1 // pred_region
      _
    $region13: #{_output_forward.1} parent=1 // pred_fallthru
      _
    %v15 = vld [vmem:[%s0] sm:$0xff]
    %v16 = vld [vmem:[%s1] sm:$0xff]
    %v17 = vld [vmem:[%s1 + $0x8] sm:$0xff]
    %v18 = vld [vmem:[%s1 + $0x10] sm:$0xff]
    %v19 = vld [vmem:[%s1 + $0x18] sm:$0xff]
    %v20 = vld [vmem:[%s2] sm:$0x1]
    %v22 = vlaneseq
    %v23 = vshrl.u32 %v22, 7
    %v24 = vsub.s32 0, %v23
    %v25 = vrot.slane %v20, %v24
    %vm27 = vcmask 261120
    %v29 = vsel %vm27, %v15, 0
    %31 = vmatprep.subr.mxu0 0.0
    %32 = vmatpush1.msra.mxu0 0.0
    %33 = vmatprep.subr.mxu0 0.0
    %34 = vmatpush1.msra.mxu0 0.0
    %35 = vmatprep.subr.mxu0 0.0
    %36 = vmatpush1.msra.mxu0 0.0
    %37 = vmatprep.subr.mxu0 0.0
    %38 = vmatpush1.msra.mxu0 0.0
    %39 = vmatprep.subr.mxu0 0.0
    %40 = vmatpush1.msra.mxu0 0.0
    %41 = vmatprep.subr.mxu0 0.0
    %42 = vmatpush1.msra.mxu0 0.0
    %43 = vmatprep.subr.mxu0 0.0
    %44 = vmatpush1.msra.mxu0 0.0
    %45 = vmatprep.subr.mxu0 0.0
    %46 = vmatpush1.msra.mxu0 0.0
    %47 = vmatprep.subr.mxu0 0.0
    %48 = vmatpush1.msra.mxu0 0.0
    %49 = vmatprep.subr.mxu0 0.0
    %50 = vmatpush1.msra.mxu0 0.0
    %51 = vmatprep.subr.mxu0 0.0
    %52 = vmatpush1.msra.mxu0 0.0
    %53 = vmatprep.subr.mxu0 0.0
    %54 = vmatpush1.msra.mxu0 0.0
    %55 = vmatprep.subr.mxu0 0.0
    %56 = vmatpush1.msra.mxu0 %v19
    %57 = vmatprep.subr.mxu0 0.0
    %58 = vmatpush1.msra.mxu0 %v18
    %59 = vmatprep.subr.mxu0 0.0
    %60 = vmatpush1.msra.mxu0 %v17
    %61 = vmatprep.subr.mxu0 0.0
    %62 = vmatpush1.msra.mxu0 %v16
    %63 = vmatprep.subr.mxu0 0.0
    %64 = vmatpush2.msra.mxu0 0.0
    %65 = vmatprep.subr.mxu0 0.0
    %66 = vmatpush2.msra.mxu0 0.0
    %67 = vmatprep.subr.mxu0 0.0
    %68 = vmatpush2.msra.mxu0 0.0
    %69 = vmatprep.subr.mxu0 0.0
    %70 = vmatpush2.msra.mxu0 0.0
    %71 = vmatprep.subr.mxu0 0.0
    %72 = vmatpush2.msra.mxu0 0.0
    %73 = vmatprep.subr.mxu0 0.0
    %74 = vmatpush2.msra.mxu0 0.0
    %75 = vmatprep.subr.mxu0 0.0
    %76 = vmatpush2.msra.mxu0 0.0
    %77 = vmatprep.subr.mxu0 0.0
    %78 = vmatpush2.msra.mxu0 0.0
    %79 = vmatprep.subr.mxu0 0.0
    %80 = vmatpush2.msra.mxu0 0.0
    %81 = vmatprep.subr.mxu0 0.0
    %82 = vmatpush2.msra.mxu0 0.0
    %83 = vmatprep.subr.mxu0 0.0
    %84 = vmatpush2.msra.mxu0 0.0
    %85 = vmatprep.subr.mxu0 0.0
    %86 = vmatpush2.msra.mxu0 0.0
    %87 = vmatprep.subr.mxu0 0.0
    %88 = vmatpush2.msra.mxu0 0.0
    %89 = vmatprep.subr.mxu0 0.0
    %90 = vmatpush2.msra.mxu0 0.0
    %91 = vmatprep.subr.mxu0 0.0
    %92 = vmatpush2.msra.mxu0 0.0
    %93 = vmatprep.subr.mxu0 0.0
    %94 = vmatpush2.msra.mxu0 0.0
    %95 = vmatprep.mubr.f32.mxu0 0.0
    %96 = vmatmul.mubr.f32.gmra.mxu0 %v29
    %v97 = vpop.f32.mrf.mxu0
    %v98 = vadd.f32 %v25, %v97
    %v99 = vpop.f32.mrf.mxu0
    %100 = vdwg.mxu0
    %101 = vmax.xlane.f32.xlu0 %v98
    %v102 = vpop.xlane.xlu0 %101
    %v103 = vsub.f32 %v98, %v102
    %v104 = vmul.f32 %v103, 1.442695
    %v105 = vpow.pop %v104
    %106 = vadd.xlane.f32.xlu0 %v105
    %v107 = vpop.xlane.xlu0 %106
    %v108 = vrcp.pop %v107
    %v109 = vmul.f32 %v105, %v108
    %vm110 = vcmask 80896
    %111 = vst.msk [vmem:[#allocation2] sm:$0xff] %vm110, %v109
    // Predicated region
    $region14: #{_output_forward.1} parent=1 // pred_check
      _
    $region15: #{_output_forward.1} parent=1 // pred_check_branch
      %113 = sbr.rel (0) target = $region17
    $region16: #{_output_forward.1} parent=1 // pred_region
      %s115 = ssub.s32 128, 128
      %116 = vsyncadd [#allocation3], %s115
      %s118 = sshll.u32 [#allocation2], 4
      %s119 = int_to_ptr.vmem [resolvable:$true] %s118
      %121 = dma.vmem_to_hbm [thread:$0]  %s119, 128, %s3, [#allocation3]
    $region17: #{_output_forward.1} parent=1 // pred_fallthru
      _
    // Predicated region
    $region18: #{_output_forward.1} parent=1 // pred_check
      _
    $region19: #{_output_forward.1} parent=1 // pred_check_branch
      %123 = sbr.rel (0) target = $region21
    $region20: #{_output_forward.1} parent=1 // pred_region
      %124 = dma.done [#allocation3], 128
    $region21: #{_output_forward.1} parent=1 // pred_fallthru
      _
    %125 = vsyncpa [#allocation3], 1

</llo_original>
